<compile_context>
chip_gen: v5e
topology: v5e:2x2
jax: 0.10.0
libtpu: 0.0.40
codegen_flags: <defaults>
</compile_context>

<pallas_src>
import jax
import jax.numpy as jnp
from jax.experimental import pallas as pl
from jax.experimental.pallas import tpu as pltpu

# smp defaults
_TV_ALPHA = 0.5
_TV_BETA = 0.5
_TV_SMOOTH = 0.0
_TV_EPS = 1e-7
_W1 = 0.5
_W2 = 0.5


def _focal_tversky_kernel(x_ref, t_ref,
                          focal_out, inter_out, sump_out, sumt_out,
                          acc_focal, acc_inter, acc_p, acc_t):
    j = pl.program_id(1)                       # column (reduction) step

    @pl.when(j == 0)
    def _init():
        acc_focal[...] = jnp.zeros_like(acc_focal)
        acc_inter[...] = jnp.zeros_like(acc_inter)
        acc_p[...] = jnp.zeros_like(acc_p)
        acc_t[...] = jnp.zeros_like(acc_t)

    x = x_ref[...].astype(jnp.float32)
    t = t_ref[...].astype(jnp.float32)

    # ---- shared transcendentals: one exp(-|x|) covers BCE and sigmoid ----
    e = jnp.exp(-jnp.abs(x))                              # exp(-|x|)
    # log(1+e) instead of log1p: e <= 1 so accuracy loss is negligible for this loss.
    bce = jnp.maximum(x, 0.0) - x * t + jnp.log(1.0 + e)  # stable BCE-with-logits
    inv = 1.0 / (1.0 + e)                                 # full-precision reciprocal
    p = jnp.where(x >= 0.0, inv, e * inv)                 # sigmoid(x)
    pt = jnp.exp(-bce)                                    # exact torch formula exp(logpt)
    w = 1.0 - pt
    focal_elem = (w * w) * bce                            # gamma == 2 -> square, no pow

    # ---- lane-resident partial accumulation (VPU adds only, no cross-lane work) ----
    lw = acc_focal.shape[1]          # accumulator lane width (128 normally)
    tile = x.shape[1]
    nch = tile // lw

    def fold(a):
        s = a[:, 0:lw]
        for c in range(1, nch):
            s = s + a[:, c * lw:(c + 1) * lw]
        return s

    acc_focal[...] += fold(focal_elem)
    acc_inter[...] += fold(p * t)
    acc_p[...] += fold(p)
    acc_t[...] += fold(t)

    # ---- epilogue: single cross-lane (XLU) reduction, tiny per-row outputs ----
    @pl.when(j == pl.num_programs(1) - 1)
    def _finalize():
        focal_out[...] = jnp.sum(acc_focal[...], axis=1, keepdims=True)
        inter_out[...] = jnp.sum(acc_inter[...], axis=1, keepdims=True)
        sump_out[...] = jnp.sum(acc_p[...], axis=1, keepdims=True)
        sumt_out[...] = jnp.sum(acc_t[...], axis=1, keepdims=True)


def _pick_tiles(rows, cols, block_budget_bytes=2 * 1024 * 1024):
    """(row_tile, col_tile): biggest 8/128-aligned blocks within ~2 MiB per input block."""
    budget = block_budget_bytes // 4  # f32 elements per input block
    row_cands = [r for r in (512, 256, 128, 64, 32, 16, 8) if rows % r == 0] or [rows]
    col_cands = [c for c in (16384, 8192, 4096, 2048, 1024, 512, 256, 128)
                 if cols % c == 0] or [cols]
    # Prefer a real multi-step column pipeline (>=2 steps) so DMA overlaps compute.
    for r in row_cands:
        for c in col_cands:
            if r * c <= budget and cols // c >= 2:
                return r, c
    for r in row_cands:
        for c in col_cands:
            if r * c <= budget:
                return r, c
    return row_cands[-1], col_cands[-1]


@jax.jit
def focal_and_tversky(y_pred, y_true):
    """y_pred: NCHW logits, y_true: NCHW binary targets. Returns scalar loss."""
    N, C, H, W = y_pred.shape
    R = N * C
    M = H * W
    # Free reshape (contiguous): row r = n*C + c, columns = flattened H*W.
    x2 = jnp.reshape(y_pred, (R, M))
    t2 = jnp.reshape(y_true, (R, M))

    TR, TILE = _pick_tiles(R, M)
    LW = 128 if TILE % 128 == 0 else TILE
    row_blocks = R // TR
    col_steps = M // TILE

    grid_spec = pltpu.PrefetchScalarGridSpec(
        num_scalar_prefetch=0,
        grid=(row_blocks, col_steps),
        in_specs=[pl.BlockSpec((TR, TILE), lambda i, j: (i, j)),
                  pl.BlockSpec((TR, TILE), lambda i, j: (i, j))],
        out_specs=[pl.BlockSpec((TR, 1), lambda i, j: (i, 0)),
                   pl.BlockSpec((TR, 1), lambda i, j: (i, 0)),
                   pl.BlockSpec((TR, 1), lambda i, j: (i, 0)),
                   pl.BlockSpec((TR, 1), lambda i, j: (i, 0))],
        scratch_shapes=[pltpu.VMEM((TR, LW), jnp.float32),
                        pltpu.VMEM((TR, LW), jnp.float32),
                        pltpu.VMEM((TR, LW), jnp.float32),
                        pltpu.VMEM((TR, LW), jnp.float32)],
    )

    focal_rows, inter_rows, p_rows, t_rows = pl.pallas_call(
        _focal_tversky_kernel,
        out_shape=(jax.ShapeDtypeStruct((R, 1), jnp.float32),   # per-row sum of focal terms
                   jax.ShapeDtypeStruct((R, 1), jnp.float32),   # per-row sum(p*t)
                   jax.ShapeDtypeStruct((R, 1), jnp.float32),   # per-row sum(p)
                   jax.ShapeDtypeStruct((R, 1), jnp.float32)),  # per-row sum(t)
        grid_spec=grid_spec,
        compiler_params=pltpu.CompilerParams(
            dimension_semantics=("parallel", "arbitrary"),
            vmem_limit_bytes=32 * 1024 * 1024,
        ),
    )(x2, t2)

    # ---- tiny O(N*C) finalize: regroup rows (n*C + c) per class + Tversky combine ----
    focal = jnp.sum(focal_rows) / jnp.float32(R * M)
    inter_c = jnp.sum(jnp.reshape(inter_rows, (N, C)), axis=0)
    sump_c = jnp.sum(jnp.reshape(p_rows, (N, C)), axis=0)
    sumt_c = jnp.sum(jnp.reshape(t_rows, (N, C)), axis=0)
    fp = sump_c - inter_c
    fn = sumt_c - inter_c
    denom = jnp.maximum(inter_c + _TV_ALPHA * fp + _TV_BETA * fn + _TV_SMOOTH, _TV_EPS)
    score = (inter_c + _TV_SMOOTH) / denom
    loss_c = (1.0 - score) * (sumt_c > 0.0).astype(jnp.float32)
    tversky = jnp.mean(loss_c)
    return _W1 * focal + _W2 * tversky


if __name__ == "__main__":
    key = jax.random.PRNGKey(0)
    k1, k2 = jax.random.split(key)
    # multilabel segmentation head: (N, C, H, W)
    y_pred = jax.random.normal(k1, (2, 4, 16, 16), dtype=jnp.float32)             # logits
    y_true = jax.random.bernoulli(k2, 0.3, (2, 4, 16, 16)).astype(jnp.float32)    # binary masks

    loss = focal_and_tversky(y_pred, y_true)
    jax.block_until_ready(loss)
    print("KERNEL_OK")
</pallas_src>

<mosaic_0001>
module attributes {stable_mosaic.version = 11 : i64} {
  func.func @_focal_tversky_kernel(%arg0: i32, %arg1: i32, %arg2: memref<8x128xf32, #tpu.memory_space<vmem>>, %arg3: memref<8x128xf32, #tpu.memory_space<vmem>>, %arg4: memref<8x1xf32, #tpu.memory_space<vmem>>, %arg5: memref<8x1xf32, #tpu.memory_space<vmem>>, %arg6: memref<8x1xf32, #tpu.memory_space<vmem>>, %arg7: memref<8x1xf32, #tpu.memory_space<vmem>>, %arg8: memref<8x128xf32, #tpu.memory_space<vmem>>, %arg9: memref<8x128xf32, #tpu.memory_space<vmem>>, %arg10: memref<8x128xf32, #tpu.memory_space<vmem>>, %arg11: memref<8x128xf32, #tpu.memory_space<vmem>>) attributes {dimension_semantics = [#tpu.dimension_semantics<parallel>, #tpu.dimension_semantics<arbitrary>], iteration_bounds = array<i64: 1, 2>, scalar_prefetch = 0 : i64, scratch_operands = 4 : i64, tpu.core_type = #tpu.core_type<tc>, window_params = [{transform_indices = @transform_0, window_bounds = array<i64: 8, 128>}, {transform_indices = @transform_1, window_bounds = array<i64: 8, 128>}, {transform_indices = @transform_2, window_bounds = array<i64: 8, 1>}, {transform_indices = @transform_3, window_bounds = array<i64: 8, 1>}, {transform_indices = @transform_4, window_bounds = array<i64: 8, 1>}, {transform_indices = @transform_5, window_bounds = array<i64: 8, 1>}]} {
    %c0_i32 = arith.constant 0 : i32
    %0 = arith.cmpi eq, %arg1, %c0_i32 : i32
    %1 = arith.extui %0 : i1 to i32
    %c0_i32_0 = arith.constant 0 : i32
    %2 = arith.cmpi ne, %1, %c0_i32_0 : i32
    scf.if %2 {
      %cst_28 = arith.constant 0.000000e+00 : f32
      %48 = vector.broadcast %cst_28 : f32 to vector<8x128xf32>
      %c0_29 = arith.constant 0 : index
      %c0_30 = arith.constant 0 : index
      %49 = vector.load %arg8[%c0_29, %c0_30] : memref<8x128xf32, #tpu.memory_space<vmem>>, vector<8x128xf32>
      tpu.vector_store %arg8[%c0_29, %c0_30], %48 {strides = array<i32>} : memref<8x128xf32, #tpu.memory_space<vmem>>, vector<8x128xf32>,
      %cst_31 = arith.constant 0.000000e+00 : f32
      %50 = vector.broadcast %cst_31 : f32 to vector<8x128xf32>
      %c0_32 = arith.constant 0 : index
      %c0_33 = arith.constant 0 : index
      %51 = vector.load %arg9[%c0_32, %c0_33] : memref<8x128xf32, #tpu.memory_space<vmem>>, vector<8x128xf32>
      tpu.vector_store %arg9[%c0_32, %c0_33], %50 {strides = array<i32>} : memref<8x128xf32, #tpu.memory_space<vmem>>, vector<8x128xf32>,
      %cst_34 = arith.constant 0.000000e+00 : f32
      %52 = vector.broadcast %cst_34 : f32 to vector<8x128xf32>
      %c0_35 = arith.constant 0 : index
      %c0_36 = arith.constant 0 : index
      %53 = vector.load %arg10[%c0_35, %c0_36] : memref<8x128xf32, #tpu.memory_space<vmem>>, vector<8x128xf32>
      tpu.vector_store %arg10[%c0_35, %c0_36], %52 {strides = array<i32>} : memref<8x128xf32, #tpu.memory_space<vmem>>, vector<8x128xf32>,
      %cst_37 = arith.constant 0.000000e+00 : f32
      %54 = vector.broadcast %cst_37 : f32 to vector<8x128xf32>
      %c0_38 = arith.constant 0 : index
      %c0_39 = arith.constant 0 : index
      %55 = vector.load %arg11[%c0_38, %c0_39] : memref<8x128xf32, #tpu.memory_space<vmem>>, vector<8x128xf32>
      tpu.vector_store %arg11[%c0_38, %c0_39], %54 {strides = array<i32>} : memref<8x128xf32, #tpu.memory_space<vmem>>, vector<8x128xf32>,
    } else {
    }
    %c0 = arith.constant 0 : index
    %c0_1 = arith.constant 0 : index
    %3 = vector.load %arg2[%c0, %c0_1] : memref<8x128xf32, #tpu.memory_space<vmem>>, vector<8x128xf32>
    %c0_2 = arith.constant 0 : index
    %c0_3 = arith.constant 0 : index
    %4 = vector.load %arg3[%c0_2, %c0_3] : memref<8x128xf32, #tpu.memory_space<vmem>>, vector<8x128xf32>
    %5 = math.absf %3 : vector<8x128xf32>
    %cst = arith.constant 0.000000e+00 : f32
    %6 = vector.broadcast %cst : f32 to vector<8x128xf32>
    %7 = arith.subf %6, %5 : vector<8x128xf32>
    %8 = math.exp %7 : vector<8x128xf32>
    %cst_4 = arith.constant 0.000000e+00 : f32
    %9 = vector.broadcast %cst_4 : f32 to vector<8x128xf32>
    %10 = arith.maximumf %3, %9 : vector<8x128xf32>
    %11 = arith.mulf %3, %4 : vector<8x128xf32>
    %12 = arith.subf %10, %11 : vector<8x128xf32>
    %cst_5 = arith.constant 1.000000e+00 : f32
    %13 = vector.broadcast %cst_5 : f32 to vector<8x128xf32>
    %14 = arith.addf %13, %8 : vector<8x128xf32>
    %15 = math.log %14 : vector<8x128xf32>
    %16 = arith.addf %12, %15 : vector<8x128xf32>
    %cst_6 = arith.constant 1.000000e+00 : f32
    %17 = vector.broadcast %cst_6 : f32 to vector<8x128xf32>
    %18 = arith.addf %17, %8 : vector<8x128xf32>
    %cst_7 = arith.constant 1.000000e+00 : f32
    %19 = vector.broadcast %cst_7 : f32 to vector<8x128xf32>
    %20 = arith.divf %19, %18 : vector<8x128xf32>
    %cst_8 = arith.constant 0.000000e+00 : f32
    %21 = vector.broadcast %cst_8 : f32 to vector<8x128xf32>
    %22 = arith.cmpf oge, %3, %21 : vector<8x128xf32>
    %23 = arith.mulf %8, %20 : vector<8x128xf32>
    %24 = arith.select %22, %20, %23 : vector<8x128xi1>, vector<8x128xf32>
    %cst_9 = arith.constant 0.000000e+00 : f32
    %25 = vector.broadcast %cst_9 : f32 to vector<8x128xf32>
    %26 = arith.subf %25, %16 : vector<8x128xf32>
    %27 = math.exp %26 : vector<8x128xf32>
    %cst_10 = arith.constant 1.000000e+00 : f32
    %28 = vector.broadcast %cst_10 : f32 to vector<8x128xf32>
    %29 = arith.subf %28, %27 : vector<8x128xf32>
    %30 = arith.mulf %29, %29 : vector<8x128xf32>
    %31 = arith.mulf %30, %16 : vector<8x128xf32>
    %c0_11 = arith.constant 0 : index
    %c0_12 = arith.constant 0 : index
    %32 = vector.load %arg8[%c0_11, %c0_12] : memref<8x128xf32, #tpu.memory_space<vmem>>, vector<8x128xf32>
    %33 = arith.addf %32, %31 : vector<8x128xf32>
    %c0_13 = arith.constant 0 : index
    %c0_14 = arith.constant 0 : index
    %34 = vector.load %arg8[%c0_13, %c0_14] : memref<8x128xf32, #tpu.memory_space<vmem>>, vector<8x128xf32>
    tpu.vector_store %arg8[%c0_13, %c0_14], %33 {strides = array<i32>} : memref<8x128xf32, #tpu.memory_space<vmem>>, vector<8x128xf32>,
    %c0_15 = arith.constant 0 : index
    %c0_16 = arith.constant 0 : index
    %35 = vector.load %arg9[%c0_15, %c0_16] : memref<8x128xf32, #tpu.memory_space<vmem>>, vector<8x128xf32>
    %36 = arith.mulf %24, %4 : vector<8x128xf32>
    %37 = arith.addf %35, %36 : vector<8x128xf32>
    %c0_17 = arith.constant 0 : index
    %c0_18 = arith.constant 0 : index
    %38 = vector.load %arg9[%c0_17, %c0_18] : memref<8x128xf32, #tpu.memory_space<vmem>>, vector<8x128xf32>
    tpu.vector_store %arg9[%c0_17, %c0_18], %37 {strides = array<i32>} : memref<8x128xf32, #tpu.memory_space<vmem>>, vector<8x128xf32>,
    %c0_19 = arith.constant 0 : index
    %c0_20 = arith.constant 0 : index
    %39 = vector.load %arg10[%c0_19, %c0_20] : memref<8x128xf32, #tpu.memory_space<vmem>>, vector<8x128xf32>
    %40 = arith.addf %39, %24 : vector<8x128xf32>
    %c0_21 = arith.constant 0 : index
    %c0_22 = arith.constant 0 : index
    %41 = vector.load %arg10[%c0_21, %c0_22] : memref<8x128xf32, #tpu.memory_space<vmem>>, vector<8x128xf32>
    tpu.vector_store %arg10[%c0_21, %c0_22], %40 {strides = array<i32>} : memref<8x128xf32, #tpu.memory_space<vmem>>, vector<8x128xf32>,
    %c0_23 = arith.constant 0 : index
    %c0_24 = arith.constant 0 : index
    %42 = vector.load %arg11[%c0_23, %c0_24] : memref<8x128xf32, #tpu.memory_space<vmem>>, vector<8x128xf32>
    %43 = arith.addf %42, %4 : vector<8x128xf32>
    %c0_25 = arith.constant 0 : index
    %c0_26 = arith.constant 0 : index
    %44 = vector.load %arg11[%c0_25, %c0_26] : memref<8x128xf32, #tpu.memory_space<vmem>>, vector<8x128xf32>
    tpu.vector_store %arg11[%c0_25, %c0_26], %43 {strides = array<i32>} : memref<8x128xf32, #tpu.memory_space<vmem>>, vector<8x128xf32>,
    %c1_i32 = arith.constant 1 : i32
    %45 = arith.cmpi eq, %arg1, %c1_i32 : i32
    %46 = arith.extui %45 : i1 to i32
    %c0_i32_27 = arith.constant 0 : i32
    %47 = arith.cmpi ne, %46, %c0_i32_27 : i32
    scf.if %47 {
      %c0_28 = arith.constant 0 : index
      %c0_29 = arith.constant 0 : index
      %48 = vector.load %arg8[%c0_28, %c0_29] : memref<8x128xf32, #tpu.memory_space<vmem>>, vector<8x128xf32>
      %cst_30 = arith.constant dense<0.000000e+00> : vector<8xf32>
      %49 = vector.multi_reduction <add>, %48, %cst_30 [1] : vector<8x128xf32> to vector<8xf32>
      %50 = vector.shape_cast %49 : vector<8xf32> to vector<8x1xf32>
      %c0_31 = arith.constant 0 : index
      %c0_32 = arith.constant 0 : index
      %51 = vector.load %arg4[%c0_31, %c0_32] : memref<8x1xf32, #tpu.memory_space<vmem>>, vector<8x1xf32>
      tpu.vector_store %arg4[%c0_31, %c0_32], %50 {strides = array<i32>} : memref<8x1xf32, #tpu.memory_space<vmem>>, vector<8x1xf32>,
      %c0_33 = arith.constant 0 : index
      %c0_34 = arith.constant 0 : index
      %52 = vector.load %arg9[%c0_33, %c0_34] : memref<8x128xf32, #tpu.memory_space<vmem>>, vector<8x128xf32>
      %cst_35 = arith.constant dense<0.000000e+00> : vector<8xf32>
      %53 = vector.multi_reduction <add>, %52, %cst_35 [1] : vector<8x128xf32> to vector<8xf32>
      %54 = vector.shape_cast %53 : vector<8xf32> to vector<8x1xf32>
      %c0_36 = arith.constant 0 : index
      %c0_37 = arith.constant 0 : index
      %55 = vector.load %arg5[%c0_36, %c0_37] : memref<8x1xf32, #tpu.memory_space<vmem>>, vector<8x1xf32>
      tpu.vector_store %arg5[%c0_36, %c0_37], %54 {strides = array<i32>} : memref<8x1xf32, #tpu.memory_space<vmem>>, vector<8x1xf32>,
      %c0_38 = arith.constant 0 : index
      %c0_39 = arith.constant 0 : index
      %56 = vector.load %arg10[%c0_38, %c0_39] : memref<8x128xf32, #tpu.memory_space<vmem>>, vector<8x128xf32>
      %cst_40 = arith.constant dense<0.000000e+00> : vector<8xf32>
      %57 = vector.multi_reduction <add>, %56, %cst_40 [1] : vector<8x128xf32> to vector<8xf32>
      %58 = vector.shape_cast %57 : vector<8xf32> to vector<8x1xf32>
      %c0_41 = arith.constant 0 : index
      %c0_42 = arith.constant 0 : index
      %59 = vector.load %arg6[%c0_41, %c0_42] : memref<8x1xf32, #tpu.memory_space<vmem>>, vector<8x1xf32>
      tpu.vector_store %arg6[%c0_41, %c0_42], %58 {strides = array<i32>} : memref<8x1xf32, #tpu.memory_space<vmem>>, vector<8x1xf32>,
      %c0_43 = arith.constant 0 : index
      %c0_44 = arith.constant 0 : index
      %60 = vector.load %arg11[%c0_43, %c0_44] : memref<8x128xf32, #tpu.memory_space<vmem>>, vector<8x128xf32>
      %cst_45 = arith.constant dense<0.000000e+00> : vector<8xf32>
      %61 = vector.multi_reduction <add>, %60, %cst_45 [1] : vector<8x128xf32> to vector<8xf32>
      %62 = vector.shape_cast %61 : vector<8xf32> to vector<8x1xf32>
      %c0_46 = arith.constant 0 : index
      %c0_47 = arith.constant 0 : index
      %63 = vector.load %arg7[%c0_46, %c0_47] : memref<8x1xf32, #tpu.memory_space<vmem>>, vector<8x1xf32>
      tpu.vector_store %arg7[%c0_46, %c0_47], %62 {strides = array<i32>} : memref<8x1xf32, #tpu.memory_space<vmem>>, vector<8x1xf32>,
    } else {
    }
    return
  }
  func.func @transform_0(%arg0: i32, %arg1: i32) -> (i32, i32) {
    %c0_i32 = arith.constant 0 : i32
    return %arg0, %arg1 : i32, i32
  }
  func.func @transform_1(%arg0: i32, %arg1: i32) -> (i32, i32) {
    %c0_i32 = arith.constant 0 : i32
    return %arg0, %arg1 : i32, i32
  }
  func.func @transform_2(%arg0: i32, %arg1: i32) -> (i32, i32) {
    %c0_i32 = arith.constant 0 : i32
    %c0_i32_0 = arith.constant 0 : i32
    return %arg0, %c0_i32 : i32, i32
  }
  func.func @transform_3(%arg0: i32, %arg1: i32) -> (i32, i32) {
    %c0_i32 = arith.constant 0 : i32
    %c0_i32_0 = arith.constant 0 : i32
    return %arg0, %c0_i32 : i32, i32
  }
  func.func @transform_4(%arg0: i32, %arg1: i32) -> (i32, i32) {
    %c0_i32 = arith.constant 0 : i32
    %c0_i32_0 = arith.constant 0 : i32
    return %arg0, %c0_i32 : i32, i32
  }
  func.func @transform_5(%arg0: i32, %arg1: i32) -> (i32, i32) {
    %c0_i32 = arith.constant 0 : i32
    %c0_i32_0 = arith.constant 0 : i32
    return %arg0, %c0_i32 : i32, i32
  }
}

</mosaic_0001>

<llo_original>
// kernel: focal_and_tversky.1
$region0: #{focal_and_tversky.1}
  #allocation0 [shape = 'u32[]', space=smem, size = 0x4, offset = 0x4, fixed_abs, tag = 'smem constant byte address 0x4 - core index']
  #allocation1 [shape = 'u32[72,128]{1,0:T(1,128)}', space=vmem, size = 0x9000, scoped, tag = 'internal scratch']
  #allocation2 [shape = 'f32[8,128]{1,0:T(8,128)}', space=vmem, size = 0x1000, scoped, tag = 'scratch operand']
  #allocation3 [shape = 'f32[8,128]{1,0:T(8,128)}', space=vmem, size = 0x1000, scoped, tag = 'scratch operand']
  #allocation4 [shape = 'f32[8,128]{1,0:T(8,128)}', space=vmem, size = 0x1000, scoped, tag = 'scratch operand']
  #allocation5 [shape = 'f32[8,128]{1,0:T(8,128)}', space=vmem, size = 0x1000, scoped, tag = 'scratch operand']
  %s0 = inlined_call_operand.vmem [shape: f32[8,256], index: 0, kind: input, shape index: {}]
  %s1 = inlined_call_operand.vmem [shape: f32[8,256], index: 1, kind: input, shape index: {}]
  %s2 = inlined_call_operand.vmem [shape: f32[8,1], index: 2, kind: output, shape index: {0}]
  %s3 = inlined_call_operand.vmem [shape: f32[8,1], index: 3, kind: output, shape index: {1}]
  %s4 = inlined_call_operand.vmem [shape: f32[8,1], index: 4, kind: output, shape index: {2}]
  %s5 = inlined_call_operand.vmem [shape: f32[8,1], index: 5, kind: output, shape index: {3}]
  %6 = xla_tuple %s2, %s3, %s4, %s5
  %s7 = sld [smem:[#allocation0]]
  $region73: #{focal_and_tversky.1} parent=0
    _
  %s9 = ssub.s32 1, %s7
  %s10 = scalar_select 0, %s9, %s7
  loop: start=0, step=1, limit=4
  $region2: #{focal_and_tversky.1} parent=0 // loop_pre_header
    _
  $region3: #{focal_and_tversky.1} parent=0 // loop_header
    %s12 = sphi 0, %s16
    %p13 = scmp.ge.s32.totalorder %s12, 4
    %s19 = sphi 0, %s31
    %s20 = sphi 0, %s27
    %s21 = sphi 0, %s19
    %s22 = sphi 0, %s20
    %s23 = sphi 0, %s21
    %s24 = sphi 0, %s22
    %s36 = sphi 0, %s38
    %s39 = sphi 0, %s36
    %s40 = sphi 0, %s39
    %s56 = sphi 0, %s40
    %s64 = sphi 0, %s66
    %s67 = sphi 0, %s64
    %s68 = sphi 0, %s67
    %s84 = sphi 0, %s68
    %s90 = sphi 0, %s92
    %s93 = sphi 0, %s90
    %s94 = sphi 0, %s93
    %s110 = sphi 0, %s94
    %s116 = sphi 0, %s118
    %s119 = sphi 0, %s116
    %s120 = sphi 0, %s119
    %s136 = sphi 0, %s120
    %s142 = sphi 0, %s144
    %s145 = sphi 0, %s142
    %s146 = sphi 0, %s145
    %s162 = sphi 0, %s146
    %s168 = sphi 0, %s170
    %s171 = sphi 0, %s168
    %s172 = sphi 0, %s171
    %s188 = sphi 0, %s172
  $region4: #{focal_and_tversky.1} parent=0 // loop_header_branch
    %15 = sbr.rel (%p13) target = $region8
  $region5: #{focal_and_tversky.1} parent=0 // loop_body
    %s17 = ssub.s32 %s12, 1
    %s18 = ssub.s32 %s12, 2
    %s25 = sadd.s32 1, %s20
    %p26 = scmp.ge.s32.totalorder %s25, 2
    %s27 = scalar_select %p26, 0, %s25
    %s28 = sadd.s32 1, %s19
    %s29 = scalar_select %p26, %s28, %s19
    %p30 = scmp.ge.s32.totalorder %s29, 1
    %s31 = scalar_select %p30, 0, %s29
    %s32 = ssub.s32 %s19, %s31
    %s33 = ssub.s32 %s20, %s27
    %s34 = sor.u32 %s32, %s33
    %p35 = scmp.eq.s32.totalorder %s34, 0
    %s37 = sadd.s32 %s36, 1
    %s38 = scalar_select %p35, %s36, %s37
    %p41 = pneg %p35
    %p42 = scmp.eq.s32.totalorder %s12, 1
    %p43 = por %p41, %p42
    %p44 = scmp.ne.s32.totalorder %s36, %s39
    %p45 = scmp.eq.s32.totalorder %s12, 0
    %p46 = por %p44, %p45
    %p47 = scmp.ne.s32.totalorder %s36, %s39
    %p48 = scmp.eq.s32.totalorder %s17, 1
    %p49 = por %p47, %p48
    %p50 = scmp.ne.s32.totalorder %s39, %s40
    %p51 = scmp.eq.s32.totalorder %s17, 0
    %p52 = por %p50, %p51
    %p53 = scmp.ne.s32.totalorder %s39, %s40
    %p54 = scmp.eq.s32.totalorder %s18, 1
    %p55 = por %p53, %p54
    %p57 = scmp.ne.s32.totalorder %s40, %s56
    %p58 = scmp.eq.s32.totalorder %s18, 0
    %p59 = por %p57, %p58
    %s60 = ssub.s32 %s19, %s31
    %s61 = ssub.s32 %s20, %s27
    %s62 = sor.u32 %s60, %s61
    %p63 = scmp.eq.s32.totalorder %s62, 0
    %s65 = sadd.s32 %s64, 1
    %s66 = scalar_select %p63, %s64, %s65
    %p69 = pneg %p63
    %p70 = scmp.eq.s32.totalorder %s12, 1
    %p71 = por %p69, %p70
    %p72 = scmp.ne.s32.totalorder %s64, %s67
    %p73 = scmp.eq.s32.totalorder %s12, 0
    %p74 = por %p72, %p73
    %p75 = scmp.ne.s32.totalorder %s64, %s67
    %p76 = scmp.eq.s32.totalorder %s17, 1
    %p77 = por %p75, %p76
    %p78 = scmp.ne.s32.totalorder %s67, %s68
    %p79 = scmp.eq.s32.totalorder %s17, 0
    %p80 = por %p78, %p79
    %p81 = scmp.ne.s32.totalorder %s67, %s68
    %p82 = scmp.eq.s32.totalorder %s18, 1
    %p83 = por %p81, %p82
    %p85 = scmp.ne.s32.totalorder %s68, %s84
    %p86 = scmp.eq.s32.totalorder %s18, 0
    %p87 = por %p85, %p86
    %s88 = ssub.s32 %s19, %s31
    %p89 = scmp.eq.s32.totalorder %s88, 0
    %s91 = sadd.s32 %s90, 1
    %s92 = scalar_select %p89, %s90, %s91
    %p95 = pneg %p89
    %p96 = scmp.eq.s32.totalorder %s12, 1
    %p97 = por %p95, %p96
    %p98 = scmp.ne.s32.totalorder %s90, %s93
    %p99 = scmp.eq.s32.totalorder %s12, 0
    %p100 = por %p98, %p99
    %p101 = scmp.ne.s32.totalorder %s90, %s93
    %p102 = scmp.eq.s32.totalorder %s17, 1
    %p103 = por %p101, %p102
    %p104 = scmp.ne.s32.totalorder %s93, %s94
    %p105 = scmp.eq.s32.totalorder %s17, 0
    %p106 = por %p104, %p105
    %p107 = scmp.ne.s32.totalorder %s93, %s94
    %p108 = scmp.eq.s32.totalorder %s18, 1
    %p109 = por %p107, %p108
    %p111 = scmp.ne.s32.totalorder %s94, %s110
    %p112 = scmp.eq.s32.totalorder %s18, 0
    %p113 = por %p111, %p112
    %s114 = ssub.s32 %s19, %s31
    %p115 = scmp.eq.s32.totalorder %s114, 0
    %s117 = sadd.s32 %s116, 1
    %s118 = scalar_select %p115, %s116, %s117
    %p121 = pneg %p115
    %p122 = scmp.eq.s32.totalorder %s12, 1
    %p123 = por %p121, %p122
    %p124 = scmp.ne.s32.totalorder %s116, %s119
    %p125 = scmp.eq.s32.totalorder %s12, 0
    %p126 = por %p124, %p125
    %p127 = scmp.ne.s32.totalorder %s116, %s119
    %p128 = scmp.eq.s32.totalorder %s17, 1
    %p129 = por %p127, %p128
    %p130 = scmp.ne.s32.totalorder %s119, %s120
    %p131 = scmp.eq.s32.totalorder %s17, 0
    %p132 = por %p130, %p131
    %p133 = scmp.ne.s32.totalorder %s119, %s120
    %p134 = scmp.eq.s32.totalorder %s18, 1
    %p135 = por %p133, %p134
    %p137 = scmp.ne.s32.totalorder %s120, %s136
    %p138 = scmp.eq.s32.totalorder %s18, 0
    %p139 = por %p137, %p138
    %s140 = ssub.s32 %s19, %s31
    %p141 = scmp.eq.s32.totalorder %s140, 0
    %s143 = sadd.s32 %s142, 1
    %s144 = scalar_select %p141, %s142, %s143
    %p147 = pneg %p141
    %p148 = scmp.eq.s32.totalorder %s12, 1
    %p149 = por %p147, %p148
    %p150 = scmp.ne.s32.totalorder %s142, %s145
    %p151 = scmp.eq.s32.totalorder %s12, 0
    %p152 = por %p150, %p151
    %p153 = scmp.ne.s32.totalorder %s142, %s145
    %p154 = scmp.eq.s32.totalorder %s17, 1
    %p155 = por %p153, %p154
    %p156 = scmp.ne.s32.totalorder %s145, %s146
    %p157 = scmp.eq.s32.totalorder %s17, 0
    %p158 = por %p156, %p157
    %p159 = scmp.ne.s32.totalorder %s145, %s146
    %p160 = scmp.eq.s32.totalorder %s18, 1
    %p161 = por %p159, %p160
    %p163 = scmp.ne.s32.totalorder %s146, %s162
    %p164 = scmp.eq.s32.totalorder %s18, 0
    %p165 = por %p163, %p164
    %s166 = ssub.s32 %s19, %s31
    %p167 = scmp.eq.s32.totalorder %s166, 0
    %s169 = sadd.s32 %s168, 1
    %s170 = scalar_select %p167, %s168, %s169
    %p173 = pneg %p167
    %p174 = scmp.eq.s32.totalorder %s12, 1
    %p175 = por %p173, %p174
    %p176 = scmp.ne.s32.totalorder %s168, %s171
    %p177 = scmp.eq.s32.totalorder %s12, 0
    %p178 = por %p176, %p177
    %p179 = scmp.ne.s32.totalorder %s168, %s171
    %p180 = scmp.eq.s32.totalorder %s17, 1
    %p181 = por %p179, %p180
    %p182 = scmp.ne.s32.totalorder %s171, %s172
    %p183 = scmp.eq.s32.totalorder %s17, 0
    %p184 = por %p182, %p183
    %p185 = scmp.ne.s32.totalorder %s171, %s172
    %p186 = scmp.eq.s32.totalorder %s18, 1
    %p187 = por %p185, %p186
    %p189 = scmp.ne.s32.totalorder %s172, %s188
    %p190 = scmp.eq.s32.totalorder %s18, 0
    %p191 = por %p189, %p190
    %p192 = scmp.le.s32.totalorder 1, %s12
    %p193 = scmp.lt.s32.totalorder %s12, 3
    %p194 = pnand %p192, %p193
    %p195 = pneg %p194
    // Predicated region
    $region9: #{focal_and_tversky.1} parent=5 // pred_check
      _
    $region10: #{focal_and_tversky.1} parent=5 // pred_check_branch
      %197 = sbr.rel (%p194) target = $region12
    $region11: #{focal_and_tversky.1} parent=5 // pred_region
      %s198 = ssub.s32 %s12, 1
    $region12: #{focal_and_tversky.1} parent=5 // pred_fallthru
      _
    %p199 = scmp.lt.s32.totalorder %s12, 2
    // Predicated region
    $region13: #{focal_and_tversky.1} parent=5 // pred_check
      %p200 = pneg %p199
    $region14: #{focal_and_tversky.1} parent=5 // pred_check_branch
      %202 = sbr.rel (%p200) target = $region16
    $region15: #{focal_and_tversky.1} parent=5 // pred_region
      // Predicated region
      $region17: #{focal_and_tversky.1} parent=15 // pred_check
        %p203 = pneg %p46
      $region18: #{focal_and_tversky.1} parent=15 // pred_check_branch
        %205 = sbr.rel (%p203) target = $region20
      $region19: #{focal_and_tversky.1} parent=15 // pred_region
        %p206 = scmp.lt.s32.totalorder %s19, 0
        %s207 = scalar_select %p206, %s19, 0
        %p208 = scmp.lt.s32.totalorder %s20, 1
        %s209 = scalar_select %p208, %s20, 1
        %s210 = smul.addr %s207, 2
        %s211 = sadd.s32 %s209, %s210
        %s212 = smul.addr %s211, 8
        %s213 = scalar_lea.vmem %s0, %s212
      $region20: #{focal_and_tversky.1} parent=15 // pred_fallthru
        _
      // Predicated region
      $region21: #{focal_and_tversky.1} parent=15 // pred_check
        %p214 = pneg %p74
      $region22: #{focal_and_tversky.1} parent=15 // pred_check_branch
        %216 = sbr.rel (%p214) target = $region24
      $region23: #{focal_and_tversky.1} parent=15 // pred_region
        %p217 = scmp.lt.s32.totalorder %s19, 0
        %s218 = scalar_select %p217, %s19, 0
        %p219 = scmp.lt.s32.totalorder %s20, 1
        %s220 = scalar_select %p219, %s20, 1
        %s221 = smul.addr %s218, 2
        %s222 = sadd.s32 %s220, %s221
        %s223 = smul.addr %s222, 8
        %s224 = scalar_lea.vmem %s1, %s223
      $region24: #{focal_and_tversky.1} parent=15 // pred_fallthru
        _
    $region16: #{focal_and_tversky.1} parent=5 // pred_fallthru
      _
    %p225 = scmp.le.s32.totalorder 1, %s12
    %p226 = scmp.lt.s32.totalorder %s12, 3
    %p227 = pnand %p225, %p226
    %p228 = pneg %p227
    // Predicated region
    $region25: #{focal_and_tversky.1} parent=5 // pred_check
      _
    $region26: #{focal_and_tversky.1} parent=5 // pred_check_branch
      %230 = sbr.rel (%p227) target = $region28
    $region27: #{focal_and_tversky.1} parent=5 // pred_region
      %s231 = ssub.s32 %s12, 1
      %p232 = scmp.lt.s32.totalorder %s21, 0
      %s233 = scalar_select %p232, %s21, 0
      %p234 = scmp.lt.s32.totalorder %s22, 1
      %s235 = scalar_select %p234, %s22, 1
      %s236 = smul.addr %s233, 2
      %s237 = sadd.s32 %s235, %s236
      %s238 = smul.addr %s237, 8
      %s239 = scalar_lea.vmem %s0, %s238
      %p240 = pneg %p52
      %p241 = pneg %p49
      %p242 = scmp.lt.s32.totalorder %s21, 0
      %s243 = scalar_select %p242, %s21, 0
      %p244 = scmp.lt.s32.totalorder %s22, 1
      %s245 = scalar_select %p244, %s22, 1
      %s246 = smul.addr %s243, 2
      %s247 = sadd.s32 %s245, %s246
      %s248 = smul.addr %s247, 8
      %s249 = scalar_lea.vmem %s1, %s248
      %p250 = pneg %p80
      %p251 = pneg %p77
      %p252 = pneg %p106
      %p253 = pneg %p103
      %p254 = scmp.lt.s32.totalorder %s21, 0
      %s255 = scalar_select %p254, %s21, 0
      %s256 = smul.addr %s255, 8
      %s257 = scalar_lea.vmem %s2, %s256
      %p258 = pneg %p132
      %p259 = pneg %p129
      %p260 = scmp.lt.s32.totalorder %s21, 0
      %s261 = scalar_select %p260, %s21, 0
      %s262 = smul.addr %s261, 8
      %s263 = scalar_lea.vmem %s3, %s262
      %p264 = pneg %p158
      %p265 = pneg %p155
      %p266 = scmp.lt.s32.totalorder %s21, 0
      %s267 = scalar_select %p266, %s21, 0
      %s268 = smul.addr %s267, 8
      %s269 = scalar_lea.vmem %s4, %s268
      %p270 = pneg %p184
      %p271 = pneg %p181
      %p272 = scmp.lt.s32.totalorder %s21, 0
      %s273 = scalar_select %p272, %s21, 0
      %s274 = smul.addr %s273, 8
      %s275 = scalar_lea.vmem %s5, %s274
      %p276 = scmp.lt.s32.totalorder %s21, 0
      %s277 = scalar_select %p276, %s21, 0
      %p278 = scmp.lt.s32.totalorder %s22, 1
      %s279 = scalar_select %p278, %s22, 1
      %s280 = smul.addr %s277, 2
      %s281 = sadd.s32 %s279, %s280
      %s282 = smul.addr %s281, 8
      %s283 = scalar_lea.vmem %s0, %s282
      %p284 = scmp.lt.s32.totalorder %s21, 0
      %s285 = scalar_select %p284, %s21, 0
      %p286 = scmp.lt.s32.totalorder %s22, 1
      %s287 = scalar_select %p286, %s22, 1
      %s288 = smul.addr %s285, 2
      %s289 = sadd.s32 %s287, %s288
      %s290 = smul.addr %s289, 8
      %s291 = scalar_lea.vmem %s1, %s290
      %p292 = scmp.lt.s32.totalorder %s21, 0
      %s293 = scalar_select %p292, %s21, 0
      %s294 = smul.addr %s293, 8
      %s295 = scalar_lea.vmem %s2, %s294
      %p296 = scmp.lt.s32.totalorder %s21, 0
      %s297 = scalar_select %p296, %s21, 0
      %s298 = smul.addr %s297, 8
      %s299 = scalar_lea.vmem %s3, %s298
      %p300 = scmp.lt.s32.totalorder %s21, 0
      %s301 = scalar_select %p300, %s21, 0
      %s302 = smul.addr %s301, 8
      %s303 = scalar_lea.vmem %s4, %s302
      %p304 = scmp.lt.s32.totalorder %s21, 0
      %s305 = scalar_select %p304, %s21, 0
      %s306 = smul.addr %s305, 8
      %s307 = scalar_lea.vmem %s5, %s306
      %p308 = scmp.eq.s32.totalorder %s22, 0
      // Predicated region
      $region29: #{focal_and_tversky.1} parent=27 // pred_check
        %p309 = pneg %p308
      $region30: #{focal_and_tversky.1} parent=27 // pred_check_branch
        %311 = sbr.rel (%p309) target = $region32
      $region31: #{focal_and_tversky.1} parent=27 // pred_region
        %312 = vst [vmem:[#allocation2] sm:$0xff] 0.0
        %313 = vst [vmem:[#allocation3] sm:$0xff] 0.0
        %314 = vst [vmem:[#allocation4] sm:$0xff] 0.0
        %315 = vst [vmem:[#allocation5] sm:$0xff] 0.0
      $region32: #{focal_and_tversky.1} parent=27 // pred_fallthru
        _
      %v316 = vld [vmem:[%s283] sm:$0xff]
      %v317 = vld [vmem:[%s291] sm:$0xff]
      %v318 = vand.u32 2147483647, %v316
      %v319 = vsub.f32 0.0, %v318
      %v320 = vmul.f32 %v319, 1.442695
      %v321 = vpow.pop %v320
      %v322 = vmax.f32 %v316, 0.0
      %v323 = vmul.f32 %v316, %v317
      %v324 = vsub.f32 %v322, %v323
      %v325 = vadd.f32 %v321, 1.0
      %v326 = vlog2.pop %v325
      %v327 = vmul.f32 %v326, 0.6931472
      %v328 = vadd.f32 %v324, %v327
      %v329 = vrcp.pop %v325
      %v330 = vmul.f32 %v325, %v329
      %v331 = vsub.f32 1.0, %v330
      %v332 = vmul.f32 %v329, %v331
      %v333 = vadd.f32 %v329, %v332
      %vm334 = vweird.f32 %v325
      %vm335 = vweird.f32 %v329
      %vm336 = vmor %vm334, %vm335
      %v337 = vsel %vm336, %v329, %v333
      %v338 = vand.u32 2147483647, %v325
      %vm339 = vcmp.eq.f32.partialorder %v338, 8.507059e+37
      %v340 = vand.u32 %v325, 2147483648
      %v341 = vor.u32 1.1754944e-38, %v340
      %v342 = vsel %vm339, %v341, %v337
      %v343 = vmul.f32 1.0, %v342
      %vm344 = vcmp.ge.f32.partialorder %v316, 0.0
      %v345 = vmul.f32 %v321, %v343
      %v346 = vsel %vm344, %v343, %v345
      %v347 = vsub.f32 0.0, %v328
      %v348 = vmul.f32 %v347, 1.442695
      %v349 = vpow.pop %v348
      %v350 = vsub.f32 1.0, %v349
      %v351 = vmul.f32 %v350, %v350
      %v352 = vmul.f32 %v351, %v328
      %v353 = vld [vmem:[#allocation2] sm:$0xff]
      %v354 = vadd.f32 %v353, %v352
      %355 = vst [vmem:[#allocation2] sm:$0xff] %v354
      %v356 = vld [vmem:[#allocation3] sm:$0xff]
      %v357 = vmul.f32 %v346, %v317
      %v358 = vadd.f32 %v356, %v357
      %359 = vst [vmem:[#allocation3] sm:$0xff] %v358
      %v360 = vld [vmem:[#allocation4] sm:$0xff]
      %v361 = vadd.f32 %v360, %v346
      %362 = vst [vmem:[#allocation4] sm:$0xff] %v361
      %v363 = vld [vmem:[#allocation5] sm:$0xff]
      %v364 = vadd.f32 %v363, %v317
      %365 = vst [vmem:[#allocation5] sm:$0xff] %v364
      %p366 = scmp.eq.s32.totalorder %s22, 1
      // Predicated region
      $region33: #{focal_and_tversky.1} parent=27 // pred_check
        %p367 = pneg %p366
      $region34: #{focal_and_tversky.1} parent=27 // pred_check_branch
        %369 = sbr.rel (%p367) target = $region36
      $region35: #{focal_and_tversky.1} parent=27 // pred_region
        %v370 = vld [vmem:[#allocation2] sm:$0xff]
        %371 = vadd.xlane.f32.xlu0 %v370
        %v372 = vpop.xlane.xlu0 %371
        %vm373 = vcmask 7168
        %374 = vst.msk [vmem:[%s295] sm:$0xff] %vm373, %v372
        %v375 = vld [vmem:[#allocation3] sm:$0xff]
        %376 = vadd.xlane.f32.xlu0 %v375
        %v377 = vpop.xlane.xlu0 %376
        %378 = vst.msk [vmem:[%s299] sm:$0xff] %vm373, %v377
        %v379 = vld [vmem:[#allocation4] sm:$0xff]
        %380 = vadd.xlane.f32.xlu0 %v379
        %v381 = vpop.xlane.xlu0 %380
        %382 = vst.msk [vmem:[%s303] sm:$0xff] %vm373, %v381
        %v383 = vld [vmem:[#allocation5] sm:$0xff]
        %384 = vadd.xlane.f32.xlu0 %v383
        %v385 = vpop.xlane.xlu0 %384
        %386 = vst.msk [vmem:[%s307] sm:$0xff] %vm373, %v385
      $region36: #{focal_and_tversky.1} parent=27 // pred_fallthru
        _
      %p387 = scmp.lt.s32.totalorder %s21, 0
      %s388 = scalar_select %p387, %s21, 0
      %s389 = smul.addr %s388, 8
      %s390 = scalar_lea.vmem %s2, %s389
      %p391 = scmp.lt.s32.totalorder %s21, 0
      %s392 = scalar_select %p391, %s21, 0
      %s393 = smul.addr %s392, 8
      %s394 = scalar_lea.vmem %s3, %s393
      %p395 = scmp.lt.s32.totalorder %s21, 0
      %s396 = scalar_select %p395, %s21, 0
      %s397 = smul.addr %s396, 8
      %s398 = scalar_lea.vmem %s4, %s397
      %p399 = scmp.lt.s32.totalorder %s21, 0
      %s400 = scalar_select %p399, %s21, 0
      %s401 = smul.addr %s400, 8
      %s402 = scalar_lea.vmem %s5, %s401
      // Predicated region
      $region37: #{focal_and_tversky.1} parent=27 // pred_check
        %p403 = pneg %p103
      $region38: #{focal_and_tversky.1} parent=27 // pred_check_branch
        %405 = sbr.rel (%p403) target = $region40
      $region39: #{focal_and_tversky.1} parent=27 // pred_region
        _
      $region40: #{focal_and_tversky.1} parent=27 // pred_fallthru
        _
      // Predicated region
      $region41: #{focal_and_tversky.1} parent=27 // pred_check
        %p406 = pneg %p129
      $region42: #{focal_and_tversky.1} parent=27 // pred_check_branch
        %408 = sbr.rel (%p406) target = $region44
      $region43: #{focal_and_tversky.1} parent=27 // pred_region
        _
      $region44: #{focal_and_tversky.1} parent=27 // pred_fallthru
        _
      // Predicated region
      $region45: #{focal_and_tversky.1} parent=27 // pred_check
        %p409 = pneg %p155
      $region46: #{focal_and_tversky.1} parent=27 // pred_check_branch
        %411 = sbr.rel (%p409) target = $region48
      $region47: #{focal_and_tversky.1} parent=27 // pred_region
        _
      $region48: #{focal_and_tversky.1} parent=27 // pred_fallthru
        _
      // Predicated region
      $region49: #{focal_and_tversky.1} parent=27 // pred_check
        %p412 = pneg %p181
      $region50: #{focal_and_tversky.1} parent=27 // pred_check_branch
        %414 = sbr.rel (%p412) target = $region52
      $region51: #{focal_and_tversky.1} parent=27 // pred_region
        _
      $region52: #{focal_and_tversky.1} parent=27 // pred_fallthru
        _
      // Predicated region
      $region53: #{focal_and_tversky.1} parent=27 // pred_check
        %p415 = pneg %p103
      $region54: #{focal_and_tversky.1} parent=27 // pred_check_branch
        %417 = sbr.rel (%p415) target = $region56
      $region55: #{focal_and_tversky.1} parent=27 // pred_region
        %p418 = scmp.lt.s32.totalorder %s21, 0
        %s419 = scalar_select %p418, %s21, 0
        %s420 = smul.addr %s419, 8
        %s421 = scalar_lea.vmem %s2, %s420
      $region56: #{focal_and_tversky.1} parent=27 // pred_fallthru
        _
      // Predicated region
      $region57: #{focal_and_tversky.1} parent=27 // pred_check
        %p422 = pneg %p129
      $region58: #{focal_and_tversky.1} parent=27 // pred_check_branch
        %424 = sbr.rel (%p422) target = $region60
      $region59: #{focal_and_tversky.1} parent=27 // pred_region
        %p425 = scmp.lt.s32.totalorder %s21, 0
        %s426 = scalar_select %p425, %s21, 0
        %s427 = smul.addr %s426, 8
        %s428 = scalar_lea.vmem %s3, %s427
      $region60: #{focal_and_tversky.1} parent=27 // pred_fallthru
        _
      // Predicated region
      $region61: #{focal_and_tversky.1} parent=27 // pred_check
        %p429 = pneg %p155
      $region62: #{focal_and_tversky.1} parent=27 // pred_check_branch
        %431 = sbr.rel (%p429) target = $region64
      $region63: #{focal_and_tversky.1} parent=27 // pred_region
        %p432 = scmp.lt.s32.totalorder %s21, 0
        %s433 = scalar_select %p432, %s21, 0
        %s434 = smul.addr %s433, 8
        %s435 = scalar_lea.vmem %s4, %s434
      $region64: #{focal_and_tversky.1} parent=27 // pred_fallthru
        _
      // Predicated region
      $region65: #{focal_and_tversky.1} parent=27 // pred_check
        %p436 = pneg %p181
      $region66: #{focal_and_tversky.1} parent=27 // pred_check_branch
        %438 = sbr.rel (%p436) target = $region68
      $region67: #{focal_and_tversky.1} parent=27 // pred_region
        %p439 = scmp.lt.s32.totalorder %s21, 0
        %s440 = scalar_select %p439, %s21, 0
        %s441 = smul.addr %s440, 8
        %s442 = scalar_lea.vmem %s5, %s441
      $region68: #{focal_and_tversky.1} parent=27 // pred_fallthru
        _
    $region28: #{focal_and_tversky.1} parent=5 // pred_fallthru
      _
    %p443 = scmp.le.s32.totalorder 2, %s12
    // Predicated region
    $region69: #{focal_and_tversky.1} parent=5 // pred_check
      %p444 = pneg %p443
    $region70: #{focal_and_tversky.1} parent=5 // pred_check_branch
      %446 = sbr.rel (%p444) target = $region72
    $region71: #{focal_and_tversky.1} parent=5 // pred_region
      %s447 = ssub.s32 %s12, 2
    $region72: #{focal_and_tversky.1} parent=5 // pred_fallthru
      _
  $region6: #{focal_and_tversky.1} parent=0 // loop_footer
    %s16 = sadd.s32 1, %s12
  $region7: #{focal_and_tversky.1} parent=0 // loop_footer_branch
    %11 = sbr.rel target = $region3
  $region8: #{focal_and_tversky.1} parent=0 // loop_exit
    _

</llo_original>
